<compile_context>
chip_gen: v7x
topology: tpu7x:2x2x1
jax: 0.10.0
libtpu: 0.0.40
codegen_flags: <defaults>
</compile_context>

<pallas_src>
import functools

import jax
import jax.numpy as jnp
from jax import lax
from jax.experimental import pallas as pl
from jax.experimental.pallas import tpu as pltpu

_COMMITMENT_COST = 0.25
_KLD_SCALE = 10.0


def _round_up(x, m):
    return ((x + m - 1) // m) * m


def _split_hi_lo(x_f32):
    """Split an f32 matrix into two bf16 matrices with x ~= hi + lo."""
    hi = x_f32.astype(jnp.bfloat16)
    lo = (x_f32 - hi.astype(jnp.float32)).astype(jnp.bfloat16)
    return hi, lo


def _vq_proj_kernel(groups, n_codes, n_valid_rows,
                    z_ref, ech_ref, ecl_ref, egh_ref, egl_ref, esq_ref,
                    w_ref, b_ref, y_ref, ind_ref, sse_ref):
    """Fused VQ + output projection for one (TM, C) block of rows.

    z_ref   : (TM, C)    f32   latents, C = groups * d
    ech/ecl : (C, G*K)   bf16  block-diagonal codebook^T, hi/lo split (resident)
    egh/egl : (G*K, C)   bf16  block-diagonal codebook,  hi/lo split (resident)
    esq_ref : (1, G*K)   f32   per-code squared norms, tiled per group (resident)
    w_ref   : (C, C)     bf16  out_proj weight, pre-transposed (y = x @ W^T)
    b_ref   : (1, C)     f32   out_proj bias
    y_ref   : (TM, C)    f32   projected quantized output block
    ind_ref : (TM, G)    i32   nearest-code index per (row, group)
    sse_ref : (1, C)     f32   per-block, per-lane sum of squared error (z_q - z)
    """
    G, K = groups, n_codes
    z = z_ref[...]                                        # (TM, C) f32
    tm = z.shape[0]

    # ---- distances: ONE block-diagonal MXU matmul (3-pass hi/lo split) -------
    z_hi = z.astype(jnp.bfloat16)
    z_lo = (z - z_hi.astype(jnp.float32)).astype(jnp.bfloat16)
    e_hi = ech_ref[...]
    e_lo = ecl_ref[...]
    cross = (jnp.dot(z_hi, e_hi, preferred_element_type=jnp.float32)
             + jnp.dot(z_hi, e_lo, preferred_element_type=jnp.float32)
             + jnp.dot(z_lo, e_hi, preferred_element_type=jnp.float32))
    # |z|^2 dropped: per-row constant, argmin-invariant.
    dist = esq_ref[...] - 2.0 * cross                     # (TM, G*K)

    # ---- per-group argmin (first-index tie-break) + multi-hot selection ------
    lane = lax.broadcasted_iota(jnp.int32, dist.shape, 1)
    multihot = jnp.zeros(dist.shape, jnp.float32)
    ind_cols = []
    for g in range(G):                                    # static, tiny unroll
        dist_g = dist[:, g * K:(g + 1) * K]               # (TM, K)
        min_g = jnp.min(dist_g, axis=-1, keepdims=True)
        iota_k = lax.broadcasted_iota(jnp.int32, dist_g.shape, 1)
        ind_g = jnp.min(jnp.where(dist_g == min_g, iota_k, K),
                        axis=-1, keepdims=True).astype(jnp.int32)   # (TM, 1)
        ind_cols.append(ind_g)
        multihot = multihot + (lane == (ind_g + g * K)).astype(jnp.float32)
    ind_ref[...] = jnp.concatenate(ind_cols, axis=-1)     # (TM, G)

    # ---- codebook gather: ONE block-diagonal matmul (exact via hi/lo split) --
    mh = multihot.astype(jnp.bfloat16)                    # exact in bf16 (0/1)
    z_q = (jnp.dot(mh, egh_ref[...], preferred_element_type=jnp.float32)
           + jnp.dot(mh, egl_ref[...], preferred_element_type=jnp.float32))

    # ---- commitment-loss partial (mask padded tail rows) ----------------------
    pid = pl.program_id(0)
    row = lax.broadcasted_iota(jnp.int32, (tm, 1), 0) + pid * tm
    err = jnp.where(row < n_valid_rows, z_q - z, 0.0)
    sse_ref[...] = jnp.sum(err * err, axis=0, keepdims=True)        # (1, C)

    # ---- straight-through forward value is z_q; project it: y = z_q @ W^T + b
    y = jnp.dot(z_q.astype(jnp.bfloat16), w_ref[...],
                preferred_element_type=jnp.float32) + b_ref[...]
    y_ref[...] = y.astype(y_ref.dtype)


def _pick_row_tile(n_rows, n_cols):
    """Row-block size: ~2 MiB per (tm, C) f32 buffer, balanced across >=2 blocks."""
    target = (2 << 20) // max(4 * n_cols, 1)
    target = max(256, min(8192, _round_up(target, 256)))
    if n_rows <= target:
        return _round_up(max(n_rows, 8), 8)
    n_blocks = -(-n_rows // target)                       # cdiv -> >= 2 blocks
    return _round_up(-(-n_rows // n_blocks), 256)


def quantize_forward(z, embed_w, out_w, out_b, groups,
                     commitment_cost=_COMMITMENT_COST, kld_scale=_KLD_SCALE):
    """Forward of Quantize: returns (z_q, diff, ind) like the PyTorch module.

    z: (B, H, C) f32; embed_w: (n_embed, C // groups); out_w: (C, C); out_b: (C,).
    """
    B, H, C = z.shape
    K, d = embed_w.shape
    assert C == groups * d, "num_hiddens must equal groups * (embedding_dim//groups)"
    G = groups
    GK = G * K
    BH = B * H

    z2d = z.reshape(BH, C).astype(jnp.float32)

    # ---- wrapper-side layout plumbing (no in-kernel transposes) --------------
    e = embed_w.astype(jnp.float32)                       # (K, d)
    eye_g = jnp.eye(G, dtype=jnp.float32)
    e_cross = jnp.kron(eye_g, e.T)                        # (C, G*K) block-diag
    e_gather = jnp.kron(eye_g, e)                         # (G*K, C) block-diag
    ec_hi, ec_lo = _split_hi_lo(e_cross)
    eg_hi, eg_lo = _split_hi_lo(e_gather)
    e_sq = jnp.tile(jnp.sum(e * e, axis=1).reshape(1, K), (1, G))    # (1, G*K)
    w_t = out_w.astype(jnp.float32).T.astype(jnp.bfloat16)           # (C, C)
    b2d = out_b.astype(jnp.float32).reshape(1, C)

    # ---- tiling: large row blocks, padded tail, v7x-safe VMEM budget ---------
    tm = _pick_row_tile(BH, C)
    rows_padded = _round_up(BH, tm)
    grid_n = rows_padded // tm
    if rows_padded != BH:
        z2d = jnp.pad(z2d, ((0, rows_padded - BH), (0, 0)))

    tile_bytes = tm * C * 4
    ind_bytes = tm * G * 4
    resident = 2 * (C * GK * 2) + 2 * (GK * C * 2) + GK * 4 + C * C * 2 + C * 4
    needed = 2 * (2 * tile_bytes + ind_bytes + C * 4) + resident + (8 << 20)
    vmem_limit = int(min(max(needed, 32 << 20), 48 << 20))   # 48 MiB cap: v7x-safe

    kernel = functools.partial(_vq_proj_kernel, G, K, BH)
    y2d, ind2d, sse = pl.pallas_call(
        kernel,
        grid=(grid_n,),
        in_specs=[
            pl.BlockSpec((tm, C), lambda i: (i, 0)),      # z rows (pipelined)
            pl.BlockSpec((C, GK), lambda i: (0, 0)),      # codebook^T (hi, resident)
            pl.BlockSpec((C, GK), lambda i: (0, 0)),      # codebook^T (lo, resident)
            pl.BlockSpec((GK, C), lambda i: (0, 0)),      # codebook   (hi, resident)
            pl.BlockSpec((GK, C), lambda i: (0, 0)),      # codebook   (lo, resident)
            pl.BlockSpec((1, GK), lambda i: (0, 0)),      # |e|^2 tiled (resident)
            pl.BlockSpec((C, C), lambda i: (0, 0)),       # out_proj W^T (resident)
            pl.BlockSpec((1, C), lambda i: (0, 0)),       # out_proj bias (resident)
        ],
        out_specs=(
            pl.BlockSpec((tm, C), lambda i: (i, 0)),      # projected z_q rows
            pl.BlockSpec((tm, G), lambda i: (i, 0)),      # indices
            pl.BlockSpec((1, C), lambda i: (i, 0)),       # per-block SSE partial
        ),
        out_shape=(
            jax.ShapeDtypeStruct((rows_padded, C), jnp.float32),
            jax.ShapeDtypeStruct((rows_padded, G), jnp.int32),
            jax.ShapeDtypeStruct((grid_n, C), jnp.float32),
        ),
        compiler_params=pltpu.CompilerParams(
            dimension_semantics=("parallel",),
            vmem_limit_bytes=vmem_limit,
        ),
    )(z2d, ec_hi, ec_lo, eg_hi, eg_lo, e_sq, w_t, b2d)

    # diff = kld_scale * (commitment_cost * mse + mse); detach() is value-neutral.
    mse = jnp.sum(sse) / (BH * C)
    diff = kld_scale * (commitment_cost * mse + mse)

    z_q = y2d[:BH].reshape(B, H, C)
    ind = ind2d[:BH].reshape(B, H * groups)
    return z_q, diff, ind


def _reference(z, embed_w, out_w, out_b, groups,
               commitment_cost=_COMMITMENT_COST, kld_scale=_KLD_SCALE):
    """Pure-JAX f32 reference of the PyTorch forward (eval path)."""
    B, H, C = z.shape
    K, d = embed_w.shape
    flat = z.reshape(-1, d).astype(jnp.float32)                      # (B*H*G, d)
    e = embed_w.astype(jnp.float32)
    dist = jnp.sum((flat[:, None, :] - e[None, :, :]) ** 2, axis=-1)  # (N, K)
    ind = jnp.argmin(dist, axis=1).astype(jnp.int32)
    z_q = e[ind]
    mse = jnp.mean((z_q - flat) ** 2)
    diff = kld_scale * (commitment_cost * mse + mse)
    z_q = z_q.reshape(B, H, C)
    y = jnp.dot(z_q, out_w.astype(jnp.float32).T,
                precision=jax.lax.Precision.HIGHEST) + out_b.astype(jnp.float32)
    return y, diff, ind.reshape(B, H * groups)


if __name__ == "__main__":
    # Small, deterministic config consistent with the module:
    # num_hiddens=32, n_embed=16, groups=4  ->  embedding_dim//groups = 8
    B, H, num_hiddens = 2, 8, 32
    n_embed, groups = 16, 4
    d = num_hiddens // groups

    key = jax.random.PRNGKey(0)
    k_z, k_e, k_w, k_b = jax.random.split(key, 4)

    z = jax.random.normal(k_z, (B, H, num_hiddens), dtype=jnp.float32)

    # nn.Embedding default init: N(0, 1)
    embed_w = jax.random.normal(k_e, (n_embed, d), dtype=jnp.float32)
    # nn.Linear default init: U(-1/sqrt(in), 1/sqrt(in))
    bound = 1.0 / (num_hiddens ** 0.5)
    out_w = jax.random.uniform(
        k_w, (num_hiddens, num_hiddens), minval=-bound, maxval=bound, dtype=jnp.float32
    )
    out_b = jax.random.uniform(
        k_b, (num_hiddens,), minval=-bound, maxval=bound, dtype=jnp.float32
    )

    # TODO(synk): the training-only kmeans codebook init (scipy kmeans2, gated on
    # data_initialized == 0) is a host-side one-time initializer with no Pallas
    # equivalent; the eval-path semantics are implemented exactly.

    fwd = jax.jit(quantize_forward, static_argnames=("groups",))
    z_q, diff, ind = fwd(z, embed_w, out_w, out_b, groups=groups)
    jax.block_until_ready((z_q, diff, ind))

    y_ref, diff_ref, ind_ref = _reference(z, embed_w, out_w, out_b, groups)

    assert z_q.shape == (B, H, num_hiddens)
    assert ind.shape == (B, H * groups)
    assert diff.shape == ()
    assert bool(jnp.array_equal(ind, ind_ref)), "codebook index mismatch"
    assert bool(jnp.allclose(diff, diff_ref, rtol=1e-3, atol=1e-5)), "loss mismatch"
    assert bool(jnp.allclose(z_q, y_ref, rtol=5e-2, atol=5e-2)), "output mismatch"
    print("KERNEL_OK")
</pallas_src>

<mosaic_0001>
module attributes {stable_mosaic.version = 11 : i64} {
  func.func @_vq_proj_kernel(%arg0: i32, %arg1: memref<16x32xf32, #tpu.memory_space<vmem>>, %arg2: memref<32x64xbf16, #tpu.memory_space<vmem>>, %arg3: memref<32x64xbf16, #tpu.memory_space<vmem>>, %arg4: memref<64x32xbf16, #tpu.memory_space<vmem>>, %arg5: memref<64x32xbf16, #tpu.memory_space<vmem>>, %arg6: memref<1x64xf32, #tpu.memory_space<vmem>>, %arg7: memref<32x32xbf16, #tpu.memory_space<vmem>>, %arg8: memref<1x32xf32, #tpu.memory_space<vmem>>, %arg9: memref<16x32xf32, #tpu.memory_space<vmem>>, %arg10: memref<16x4xi32, #tpu.memory_space<vmem>>, %arg11: memref<1x32xf32, #tpu.memory_space<vmem>>) attributes {dimension_semantics = [#tpu.dimension_semantics<parallel>], iteration_bounds = array<i64: 1>, scalar_prefetch = 0 : i64, scratch_operands = 0 : i64, tpu.core_type = #tpu.core_type<tc>, window_params = [{transform_indices = @transform_0, window_bounds = array<i64: 16, 32>}, {pipeline_mode = #tpu.pipeline_mode<synchronous>, transform_indices = @transform_1, window_bounds = array<i64: 32, 64>}, {pipeline_mode = #tpu.pipeline_mode<synchronous>, transform_indices = @transform_2, window_bounds = array<i64: 32, 64>}, {pipeline_mode = #tpu.pipeline_mode<synchronous>, transform_indices = @transform_3, window_bounds = array<i64: 64, 32>}, {pipeline_mode = #tpu.pipeline_mode<synchronous>, transform_indices = @transform_4, window_bounds = array<i64: 64, 32>}, {pipeline_mode = #tpu.pipeline_mode<synchronous>, transform_indices = @transform_5, window_bounds = array<i64: 1, 64>}, {pipeline_mode = #tpu.pipeline_mode<synchronous>, transform_indices = @transform_6, window_bounds = array<i64: 32, 32>}, {pipeline_mode = #tpu.pipeline_mode<synchronous>, transform_indices = @transform_7, window_bounds = array<i64: 1, 32>}, {transform_indices = @transform_8, window_bounds = array<i64: 16, 32>}, {transform_indices = @transform_9, window_bounds = array<i64: 16, 4>}, {transform_indices = @transform_10, window_bounds = array<i64: 1, 32>}]} {
    %c0 = arith.constant 0 : index
    %c0_0 = arith.constant 0 : index
    %0 = vector.load %arg1[%c0, %c0_0] : memref<16x32xf32, #tpu.memory_space<vmem>>, vector<16x32xf32>
    %1 = arith.truncf %0 : vector<16x32xf32> to vector<16x32xbf16>
    %2 = arith.extf %1 : vector<16x32xbf16> to vector<16x32xf32>
    %3 = arith.subf %0, %2 : vector<16x32xf32>
    %4 = arith.truncf %3 : vector<16x32xf32> to vector<16x32xbf16>
    %c0_1 = arith.constant 0 : index
    %c0_2 = arith.constant 0 : index
    %5 = vector.load %arg2[%c0_1, %c0_2] : memref<32x64xbf16, #tpu.memory_space<vmem>>, vector<32x64xbf16>
    %c0_3 = arith.constant 0 : index
    %c0_4 = arith.constant 0 : index
    %6 = vector.load %arg3[%c0_3, %c0_4] : memref<32x64xbf16, #tpu.memory_space<vmem>>, vector<32x64xbf16>
    %cst = arith.constant dense<0.000000e+00> : vector<16x64xf32>
    %7 = tpu.matmul %1, %5, %cst {dimension_numbers = #tpu.dot_dimension_numbers<[1], [0], [0], [1], [0, 0, 1, 1], [], []>} : vector<16x32xbf16>, vector<32x64xbf16>, vector<16x64xf32> -> vector<16x64xf32>
    %cst_5 = arith.constant dense<0.000000e+00> : vector<16x64xf32>
    %8 = tpu.matmul %1, %6, %cst_5 {dimension_numbers = #tpu.dot_dimension_numbers<[1], [0], [0], [1], [0, 0, 1, 1], [], []>} : vector<16x32xbf16>, vector<32x64xbf16>, vector<16x64xf32> -> vector<16x64xf32>
    %9 = arith.addf %7, %8 : vector<16x64xf32>
    %cst_6 = arith.constant dense<0.000000e+00> : vector<16x64xf32>
    %10 = tpu.matmul %4, %5, %cst_6 {dimension_numbers = #tpu.dot_dimension_numbers<[1], [0], [0], [1], [0, 0, 1, 1], [], []>} : vector<16x32xbf16>, vector<32x64xbf16>, vector<16x64xf32> -> vector<16x64xf32>
    %11 = arith.addf %9, %10 : vector<16x64xf32>
    %c0_7 = arith.constant 0 : index
    %c0_8 = arith.constant 0 : index
    %12 = vector.load %arg6[%c0_7, %c0_8] : memref<1x64xf32, #tpu.memory_space<vmem>>, vector<1x64xf32>
    %cst_9 = arith.constant 2.000000e+00 : f32
    %13 = vector.broadcast %cst_9 : f32 to vector<16x64xf32>
    %14 = arith.mulf %13, %11 : vector<16x64xf32>
    %15 = vector.broadcast %12 : vector<1x64xf32> to vector<16x64xf32>
    %16 = arith.subf %15, %14 : vector<16x64xf32>
    %17 = tpu.iota {dimensions = array<i32: 1>} : vector<16x64xi32>
    %cst_10 = arith.constant 0.000000e+00 : f32
    %18 = vector.broadcast %cst_10 : f32 to vector<16x64xf32>
    %19 = vector.extract_strided_slice %16 {offsets = [0, 0], sizes = [16, 16], strides = [1, 1]} : vector<16x64xf32> to vector<16x16xf32>
    %cst_11 = arith.constant dense<0x7F800000> : vector<16xf32>
    %20 = vector.multi_reduction <minimumf>, %19, %cst_11 [1] : vector<16x16xf32> to vector<16xf32>
    %21 = vector.shape_cast %20 : vector<16xf32> to vector<16x1xf32>
    %22 = tpu.iota {dimensions = array<i32: 1>} : vector<16x16xi32>
    %23 = vector.broadcast %21 : vector<16x1xf32> to vector<16x16xf32>
    %24 = arith.cmpf oeq, %19, %23 : vector<16x16xf32>
    %c16_i32 = arith.constant 16 : i32
    %25 = vector.broadcast %c16_i32 : i32 to vector<16x16xi32>
    %26 = arith.select %24, %22, %25 : vector<16x16xi1>, vector<16x16xi32>
    %cst_12 = arith.constant dense<2147483647> : vector<16xi32>
    %27 = vector.multi_reduction <minsi>, %26, %cst_12 [1] : vector<16x16xi32> to vector<16xi32>
    %28 = vector.shape_cast %27 : vector<16xi32> to vector<16x1xi32>
    %c0_i32 = arith.constant 0 : i32
    %29 = vector.broadcast %c0_i32 : i32 to vector<16x1xi32>
    %30 = arith.addi %28, %29 : vector<16x1xi32>
    %31 = vector.broadcast %30 : vector<16x1xi32> to vector<16x64xi32>
    %32 = arith.cmpi eq, %17, %31 : vector<16x64xi32>
    %33 = arith.extui %32 : vector<16x64xi1> to vector<16x64xi32>
    %34 = arith.sitofp %33 : vector<16x64xi32> to vector<16x64xf32>
    %35 = arith.addf %18, %34 : vector<16x64xf32>
    %36 = vector.extract_strided_slice %16 {offsets = [0, 16], sizes = [16, 16], strides = [1, 1]} : vector<16x64xf32> to vector<16x16xf32>
    %cst_13 = arith.constant dense<0x7F800000> : vector<16xf32>
    %37 = vector.multi_reduction <minimumf>, %36, %cst_13 [1] : vector<16x16xf32> to vector<16xf32>
    %38 = vector.shape_cast %37 : vector<16xf32> to vector<16x1xf32>
    %39 = tpu.iota {dimensions = array<i32: 1>} : vector<16x16xi32>
    %40 = vector.broadcast %38 : vector<16x1xf32> to vector<16x16xf32>
    %41 = arith.cmpf oeq, %36, %40 : vector<16x16xf32>
    %c16_i32_14 = arith.constant 16 : i32
    %42 = vector.broadcast %c16_i32_14 : i32 to vector<16x16xi32>
    %43 = arith.select %41, %39, %42 : vector<16x16xi1>, vector<16x16xi32>
    %cst_15 = arith.constant dense<2147483647> : vector<16xi32>
    %44 = vector.multi_reduction <minsi>, %43, %cst_15 [1] : vector<16x16xi32> to vector<16xi32>
    %45 = vector.shape_cast %44 : vector<16xi32> to vector<16x1xi32>
    %c16_i32_16 = arith.constant 16 : i32
    %46 = vector.broadcast %c16_i32_16 : i32 to vector<16x1xi32>
    %47 = arith.addi %45, %46 : vector<16x1xi32>
    %48 = vector.broadcast %47 : vector<16x1xi32> to vector<16x64xi32>
    %49 = arith.cmpi eq, %17, %48 : vector<16x64xi32>
    %50 = arith.extui %49 : vector<16x64xi1> to vector<16x64xi32>
    %51 = arith.sitofp %50 : vector<16x64xi32> to vector<16x64xf32>
    %52 = arith.addf %35, %51 : vector<16x64xf32>
    %53 = vector.extract_strided_slice %16 {offsets = [0, 32], sizes = [16, 16], strides = [1, 1]} : vector<16x64xf32> to vector<16x16xf32>
    %cst_17 = arith.constant dense<0x7F800000> : vector<16xf32>
    %54 = vector.multi_reduction <minimumf>, %53, %cst_17 [1] : vector<16x16xf32> to vector<16xf32>
    %55 = vector.shape_cast %54 : vector<16xf32> to vector<16x1xf32>
    %56 = tpu.iota {dimensions = array<i32: 1>} : vector<16x16xi32>
    %57 = vector.broadcast %55 : vector<16x1xf32> to vector<16x16xf32>
    %58 = arith.cmpf oeq, %53, %57 : vector<16x16xf32>
    %c16_i32_18 = arith.constant 16 : i32
    %59 = vector.broadcast %c16_i32_18 : i32 to vector<16x16xi32>
    %60 = arith.select %58, %56, %59 : vector<16x16xi1>, vector<16x16xi32>
    %cst_19 = arith.constant dense<2147483647> : vector<16xi32>
    %61 = vector.multi_reduction <minsi>, %60, %cst_19 [1] : vector<16x16xi32> to vector<16xi32>
    %62 = vector.shape_cast %61 : vector<16xi32> to vector<16x1xi32>
    %c32_i32 = arith.constant 32 : i32
    %63 = vector.broadcast %c32_i32 : i32 to vector<16x1xi32>
    %64 = arith.addi %62, %63 : vector<16x1xi32>
    %65 = vector.broadcast %64 : vector<16x1xi32> to vector<16x64xi32>
    %66 = arith.cmpi eq, %17, %65 : vector<16x64xi32>
    %67 = arith.extui %66 : vector<16x64xi1> to vector<16x64xi32>
    %68 = arith.sitofp %67 : vector<16x64xi32> to vector<16x64xf32>
    %69 = arith.addf %52, %68 : vector<16x64xf32>
    %70 = vector.extract_strided_slice %16 {offsets = [0, 48], sizes = [16, 16], strides = [1, 1]} : vector<16x64xf32> to vector<16x16xf32>
    %cst_20 = arith.constant dense<0x7F800000> : vector<16xf32>
    %71 = vector.multi_reduction <minimumf>, %70, %cst_20 [1] : vector<16x16xf32> to vector<16xf32>
    %72 = vector.shape_cast %71 : vector<16xf32> to vector<16x1xf32>
    %73 = tpu.iota {dimensions = array<i32: 1>} : vector<16x16xi32>
    %74 = vector.broadcast %72 : vector<16x1xf32> to vector<16x16xf32>
    %75 = arith.cmpf oeq, %70, %74 : vector<16x16xf32>
    %c16_i32_21 = arith.constant 16 : i32
    %76 = vector.broadcast %c16_i32_21 : i32 to vector<16x16xi32>
    %77 = arith.select %75, %73, %76 : vector<16x16xi1>, vector<16x16xi32>
    %cst_22 = arith.constant dense<2147483647> : vector<16xi32>
    %78 = vector.multi_reduction <minsi>, %77, %cst_22 [1] : vector<16x16xi32> to vector<16xi32>
    %79 = vector.shape_cast %78 : vector<16xi32> to vector<16x1xi32>
    %c48_i32 = arith.constant 48 : i32
    %80 = vector.broadcast %c48_i32 : i32 to vector<16x1xi32>
    %81 = arith.addi %79, %80 : vector<16x1xi32>
    %82 = vector.broadcast %81 : vector<16x1xi32> to vector<16x64xi32>
    %83 = arith.cmpi eq, %17, %82 : vector<16x64xi32>
    %84 = arith.extui %83 : vector<16x64xi1> to vector<16x64xi32>
    %85 = arith.sitofp %84 : vector<16x64xi32> to vector<16x64xf32>
    %86 = arith.addf %69, %85 : vector<16x64xf32>
    %87 = tpu.concatenate %28, %45, %62, %79 in 1 : vector<16x1xi32>, vector<16x1xi32>, vector<16x1xi32>, vector<16x1xi32> -> vector<16x4xi32>
    %c0_23 = arith.constant 0 : index
    %c0_24 = arith.constant 0 : index
    %88 = vector.load %arg10[%c0_23, %c0_24] : memref<16x4xi32, #tpu.memory_space<vmem>>, vector<16x4xi32>
    tpu.vector_store %arg10[%c0_23, %c0_24], %87 {strides = array<i32>} : memref<16x4xi32, #tpu.memory_space<vmem>>, vector<16x4xi32>,
    %89 = arith.truncf %86 : vector<16x64xf32> to vector<16x64xbf16>
    %c0_25 = arith.constant 0 : index
    %c0_26 = arith.constant 0 : index
    %90 = vector.load %arg4[%c0_25, %c0_26] : memref<64x32xbf16, #tpu.memory_space<vmem>>, vector<64x32xbf16>
    %cst_27 = arith.constant dense<0.000000e+00> : vector<16x32xf32>
    %91 = tpu.matmul %89, %90, %cst_27 {dimension_numbers = #tpu.dot_dimension_numbers<[1], [0], [0], [1], [0, 0, 1, 1], [], []>} : vector<16x64xbf16>, vector<64x32xbf16>, vector<16x32xf32> -> vector<16x32xf32>
    %c0_28 = arith.constant 0 : index
    %c0_29 = arith.constant 0 : index
    %92 = vector.load %arg5[%c0_28, %c0_29] : memref<64x32xbf16, #tpu.memory_space<vmem>>, vector<64x32xbf16>
    %cst_30 = arith.constant dense<0.000000e+00> : vector<16x32xf32>
    %93 = tpu.matmul %89, %92, %cst_30 {dimension_numbers = #tpu.dot_dimension_numbers<[1], [0], [0], [1], [0, 0, 1, 1], [], []>} : vector<16x64xbf16>, vector<64x32xbf16>, vector<16x32xf32> -> vector<16x32xf32>
    %94 = arith.addf %91, %93 : vector<16x32xf32>
    %95 = tpu.iota {dimensions = array<i32: 0>} : vector<16x1xi32>
    %c16_i32_31 = arith.constant 16 : i32
    %96 = arith.muli %arg0, %c16_i32_31 : i32
    %97 = vector.broadcast %96 : i32 to vector<16x1xi32>
    %98 = arith.addi %95, %97 : vector<16x1xi32>
    %c16_i32_32 = arith.constant 16 : i32
    %99 = vector.broadcast %c16_i32_32 : i32 to vector<16x1xi32>
    %100 = arith.cmpi slt, %98, %99 : vector<16x1xi32>
    %101 = arith.subf %94, %0 : vector<16x32xf32>
    %cst_33 = arith.constant 0.000000e+00 : f32
    %102 = vector.shape_cast %100 : vector<16x1xi1> to vector<16x1xi1>
    %103 = vector.broadcast %102 : vector<16x1xi1> to vector<16x32xi1>
    %104 = vector.broadcast %cst_33 : f32 to vector<16x32xf32>
    %105 = arith.select %103, %101, %104 : vector<16x32xi1>, vector<16x32xf32>
    %106 = arith.mulf %105, %105 : vector<16x32xf32>
    %cst_34 = arith.constant dense<0.000000e+00> : vector<32xf32>
    %107 = vector.multi_reduction <add>, %106, %cst_34 [0] : vector<16x32xf32> to vector<32xf32>
    %108 = vector.shape_cast %107 : vector<32xf32> to vector<1x32xf32>
    %c0_35 = arith.constant 0 : index
    %c0_36 = arith.constant 0 : index
    %109 = vector.load %arg11[%c0_35, %c0_36] : memref<1x32xf32, #tpu.memory_space<vmem>>, vector<1x32xf32>
    tpu.vector_store %arg11[%c0_35, %c0_36], %108 {strides = array<i32>} : memref<1x32xf32, #tpu.memory_space<vmem>>, vector<1x32xf32>,
    %110 = arith.truncf %94 : vector<16x32xf32> to vector<16x32xbf16>
    %c0_37 = arith.constant 0 : index
    %c0_38 = arith.constant 0 : index
    %111 = vector.load %arg7[%c0_37, %c0_38] : memref<32x32xbf16, #tpu.memory_space<vmem>>, vector<32x32xbf16>
    %cst_39 = arith.constant dense<0.000000e+00> : vector<16x32xf32>
    %112 = tpu.matmul %110, %111, %cst_39 {dimension_numbers = #tpu.dot_dimension_numbers<[1], [0], [0], [1], [0, 0, 1, 1], [], []>} : vector<16x32xbf16>, vector<32x32xbf16>, vector<16x32xf32> -> vector<16x32xf32>
    %c0_40 = arith.constant 0 : index
    %c0_41 = arith.constant 0 : index
    %113 = vector.load %arg8[%c0_40, %c0_41] : memref<1x32xf32, #tpu.memory_space<vmem>>, vector<1x32xf32>
    %114 = vector.broadcast %113 : vector<1x32xf32> to vector<16x32xf32>
    %115 = arith.addf %112, %114 : vector<16x32xf32>
    %c0_42 = arith.constant 0 : index
    %c0_43 = arith.constant 0 : index
    %116 = vector.load %arg9[%c0_42, %c0_43] : memref<16x32xf32, #tpu.memory_space<vmem>>, vector<16x32xf32>
    tpu.vector_store %arg9[%c0_42, %c0_43], %115 {strides = array<i32>} : memref<16x32xf32, #tpu.memory_space<vmem>>, vector<16x32xf32>,
    return
  }
  func.func @transform_0(%arg0: i32) -> (i32, i32) {
    %c0_i32 = arith.constant 0 : i32
    %c0_i32_0 = arith.constant 0 : i32
    return %arg0, %c0_i32 : i32, i32
  }
  func.func @transform_1(%arg0: i32) -> (i32, i32) {
    %c0_i32 = arith.constant 0 : i32
    %c0_i32_0 = arith.constant 0 : i32
    %c0_i32_1 = arith.constant 0 : i32
    return %c0_i32, %c0_i32_0 : i32, i32
  }
  func.func @transform_2(%arg0: i32) -> (i32, i32) {
    %c0_i32 = arith.constant 0 : i32
    %c0_i32_0 = arith.constant 0 : i32
    %c0_i32_1 = arith.constant 0 : i32
    return %c0_i32, %c0_i32_0 : i32, i32
  }
  func.func @transform_3(%arg0: i32) -> (i32, i32) {
    %c0_i32 = arith.constant 0 : i32
    %c0_i32_0 = arith.constant 0 : i32
    %c0_i32_1 = arith.constant 0 : i32
    return %c0_i32, %c0_i32_0 : i32, i32
  }
  func.func @transform_4(%arg0: i32) -> (i32, i32) {
    %c0_i32 = arith.constant 0 : i32
    %c0_i32_0 = arith.constant 0 : i32
    %c0_i32_1 = arith.constant 0 : i32
    return %c0_i32, %c0_i32_0 : i32, i32
  }
  func.func @transform_5(%arg0: i32) -> (i32, i32) {
    %c0_i32 = arith.constant 0 : i32
    %c0_i32_0 = arith.constant 0 : i32
    %c0_i32_1 = arith.constant 0 : i32
    return %c0_i32, %c0_i32_0 : i32, i32
  }
  func.func @transform_6(%arg0: i32) -> (i32, i32) {
    %c0_i32 = arith.constant 0 : i32
    %c0_i32_0 = arith.constant 0 : i32
    %c0_i32_1 = arith.constant 0 : i32
    return %c0_i32, %c0_i32_0 : i32, i32
  }
  func.func @transform_7(%arg0: i32) -> (i32, i32) {
    %c0_i32 = arith.constant 0 : i32
    %c0_i32_0 = arith.constant 0 : i32
    %c0_i32_1 = arith.constant 0 : i32
    return %c0_i32, %c0_i32_0 : i32, i32
  }
  func.func @transform_8(%arg0: i32) -> (i32, i32) {
    %c0_i32 = arith.constant 0 : i32
    %c0_i32_0 = arith.constant 0 : i32
    return %arg0, %c0_i32 : i32, i32
  }
  func.func @transform_9(%arg0: i32) -> (i32, i32) {
    %c0_i32 = arith.constant 0 : i32
    %c0_i32_0 = arith.constant 0 : i32
    return %arg0, %c0_i32 : i32, i32
  }
  func.func @transform_10(%arg0: i32) -> (i32, i32) {
    %c0_i32 = arith.constant 0 : i32
    %c0_i32_0 = arith.constant 0 : i32
    return %arg0, %c0_i32 : i32, i32
  }
}

</mosaic_0001>

<llo_original>
// kernel: quantize_forward.1
$region0: #{quantize_forward.1}
  #allocation0 [shape = 'u32[]', space=smem, size = 0x4, offset = 0x4, fixed_abs, tag = 'smem constant byte address 0x4 - core index']
  #allocation1 [shape = 'u32[144,128]{1,0:T(1,128)}', space=vmem, size = 0x12000, scoped, tag = 'internal scratch']
  %s0 = inlined_call_operand.vmem [shape: f32[16,32], index: 0, kind: input, shape index: {}]
  %s1 = inlined_call_operand.vmem [shape: bf16[32,64], index: 1, kind: input, shape index: {}]
  %s2 = inlined_call_operand.vmem [shape: bf16[32,64], index: 2, kind: input, shape index: {}]
  %s3 = inlined_call_operand.vmem [shape: bf16[64,32], index: 3, kind: input, shape index: {}]
  %s4 = inlined_call_operand.vmem [shape: bf16[64,32], index: 4, kind: input, shape index: {}]
  %s5 = inlined_call_operand.vmem [shape: f32[1,64], index: 5, kind: input, shape index: {}]
  %s6 = inlined_call_operand.vmem [shape: bf16[32,32], index: 6, kind: input, shape index: {}]
  %s7 = inlined_call_operand.vmem [shape: f32[1,32], index: 7, kind: input, shape index: {}]
  %s8 = inlined_call_operand.hbm [shape: f32[16,32], index: 8, kind: output, shape index: {0}]
  %s9 = inlined_call_operand.vmem [shape: s32[16,4], index: 9, kind: output, shape index: {1}]
  %s10 = inlined_call_operand.vmem [shape: f32[1,32], index: 10, kind: output, shape index: {2}]
  %11 = xla_tuple %s8, %s9, %s10
  %s12 = sld [smem:[#allocation0]]
  $region58: #{quantize_forward.1} parent=0
    _
  %s14 = ssub.s32 1, %s12
  %s15 = scalar_select 0, %s14, %s12
  $region1: #{quantize_forward.1} parent=0
    #allocation2 [shape = 'u8[8192]{0}', space=vmem, size = 0x2000, scoped, tag = 'output window, operand 0, single buffered']
    #allocation3 [shape = 's32[1]{0}', space=sflag, size = 0x4, scoped, tag = 'scoped memory for quantize_forward.1']
    %16 = vsyncpa [#allocation3], 0
    // Predicated region
    $region2: #{quantize_forward.1} parent=1 // pred_check
      _
    $region3: #{quantize_forward.1} parent=1 // pred_check_branch
      %18 = sbr.rel (0) target = $region5
    $region4: #{quantize_forward.1} parent=1 // pred_region
      _
    $region5: #{quantize_forward.1} parent=1 // pred_fallthru
      _
    // Predicated region
    $region6: #{quantize_forward.1} parent=1 // pred_check
      _
    $region7: #{quantize_forward.1} parent=1 // pred_check_branch
      %20 = sbr.rel (0) target = $region9
    $region8: #{quantize_forward.1} parent=1 // pred_region
      _
    $region9: #{quantize_forward.1} parent=1 // pred_fallthru
      _
    // Predicated region
    $region10: #{quantize_forward.1} parent=1 // pred_check
      _
    $region11: #{quantize_forward.1} parent=1 // pred_check_branch
      %22 = sbr.rel (0) target = $region13
    $region12: #{quantize_forward.1} parent=1 // pred_region
      _
    $region13: #{quantize_forward.1} parent=1 // pred_fallthru
      _
    // Predicated region
    $region14: #{quantize_forward.1} parent=1 // pred_check
      _
    $region15: #{quantize_forward.1} parent=1 // pred_check_branch
      %24 = sbr.rel (0) target = $region17
    $region16: #{quantize_forward.1} parent=1 // pred_region
      _
    $region17: #{quantize_forward.1} parent=1 // pred_fallthru
      _
    // Predicated region
    $region18: #{quantize_forward.1} parent=1 // pred_check
      _
    $region19: #{quantize_forward.1} parent=1 // pred_check_branch
      %26 = sbr.rel (0) target = $region21
    $region20: #{quantize_forward.1} parent=1 // pred_region
      _
    $region21: #{quantize_forward.1} parent=1 // pred_fallthru
      _
    // Predicated region
    $region22: #{quantize_forward.1} parent=1 // pred_check
      _
    $region23: #{quantize_forward.1} parent=1 // pred_check_branch
      %28 = sbr.rel (0) target = $region25
    $region24: #{quantize_forward.1} parent=1 // pred_region
      _
    $region25: #{quantize_forward.1} parent=1 // pred_fallthru
      _
    // Predicated region
    $region26: #{quantize_forward.1} parent=1 // pred_check
      _
    $region27: #{quantize_forward.1} parent=1 // pred_check_branch
      %30 = sbr.rel (0) target = $region29
    $region28: #{quantize_forward.1} parent=1 // pred_region
      _
    $region29: #{quantize_forward.1} parent=1 // pred_fallthru
      _
    // Predicated region
    $region30: #{quantize_forward.1} parent=1 // pred_check
      _
    $region31: #{quantize_forward.1} parent=1 // pred_check_branch
      %32 = sbr.rel (0) target = $region33
    $region32: #{quantize_forward.1} parent=1 // pred_region
      _
    $region33: #{quantize_forward.1} parent=1 // pred_fallthru
      _
    %v34 = vld [vmem:[%s0] sm:$0xff]
    %v35 = vld [vmem:[%s0 + $0x8] sm:$0xff]
    %v36 = vpack.c.bf16 %v35, %v34
    %v37 = vunpack.c.l.bf16 %v36
    %v38 = vunpack.c.h.bf16 %v36
    %v39 = vsub.f32 %v34, %v37
    %v40 = vsub.f32 %v35, %v38
    %v41 = vpack.c.bf16 %v40, %v39
    %v42 = vld [vmem:[%s1] sm:$0xf]
    %v43 = vld [vmem:[%s1 + $0x4] sm:$0xf]
    %v44 = vld [vmem:[%s1 + $0x8] sm:$0xf]
    %v45 = vld [vmem:[%s1 + $0xc] sm:$0xf]
    %v46 = vld [vmem:[%s2] sm:$0xf]
    %v47 = vld [vmem:[%s2 + $0x4] sm:$0xf]
    %v48 = vld [vmem:[%s2 + $0x8] sm:$0xf]
    %v49 = vld [vmem:[%s2 + $0xc] sm:$0xf]
    %v54 = vunpack.c.l.b16 %v46
    %v55 = vunpack.c.l.b16 %v47
    %v56 = vunpack.c.l.b16 %v48
    %v57 = vunpack.c.l.b16 %v49
    %v58 = vpack.c.b16 %v55, %v54
    %v59 = vpack.c.b16 %v57, %v56
    %vm62 = vcmask 261120
    %v64 = vsel %vm62, %v36, 0
    %66 = vmatprep.subr.bf16.mxu0 0
    %67 = vmatpush1.bf16.msra.mxu0 %v58
    %68 = vmatprep.subr.bf16.mxu0 0
    %69 = vmatpush1.bf16.msra.mxu0 %v59
    %70 = vmatprep.subr.bf16.mxu0 0
    %71 = vmatpush1.bf16.msra.mxu0 0
    %72 = vmatprep.subr.bf16.mxu0 0
    %73 = vmatpush1.bf16.msra.mxu0 0
    %74 = vmatprep.subr.bf16.mxu0 0
    %75 = vmatpush1.bf16.msra.mxu0 0
    %76 = vmatprep.subr.bf16.mxu0 0
    %77 = vmatpush1.bf16.msra.mxu0 0
    %78 = vmatprep.subr.bf16.mxu0 0
    %79 = vmatpush1.bf16.msra.mxu0 0
    %80 = vmatprep.subr.bf16.mxu0 0
    %81 = vmatpush1.bf16.msra.mxu0 0
    %82 = vmatprep.subr.bf16.mxu0 0
    %83 = vmatpush1.bf16.msra.mxu0 0
    %84 = vmatprep.subr.bf16.mxu0 0
    %85 = vmatpush1.bf16.msra.mxu0 0
    %86 = vmatprep.subr.bf16.mxu0 0
    %87 = vmatpush1.bf16.msra.mxu0 0
    %88 = vmatprep.subr.bf16.mxu0 0
    %89 = vmatpush1.bf16.msra.mxu0 0
    %90 = vmatprep.subr.bf16.mxu0 0
    %91 = vmatpush1.bf16.msra.mxu0 0
    %92 = vmatprep.subr.bf16.mxu0 0
    %93 = vmatpush1.bf16.msra.mxu0 0
    %94 = vmatprep.subr.bf16.mxu0 0
    %95 = vmatpush1.bf16.msra.mxu0 0
    %96 = vmatprep.subr.bf16.mxu0 0
    %97 = vmatpush1.bf16.msra.mxu0 0
    %98 = vmatprep.mubr.bf16.mxu0 0
    %99 = vmatmul.mubr.bf16.gmra.mrb[0].mxu0 %v64
    %v100 = vpop.f32.mrb[0].mxu0
    %v101 = vadd.f32 0.0, %v100
    %v102 = vpop.f32.mrb[0].mxu0
    %v103 = vpop.f32.mrb[0].mxu0
    %v104 = vadd.f32 0.0, %v103
    %v105 = vpop.f32.mrb[0].mxu0
    %106 = vdwg.mxu0
    %v111 = vunpack.c.l.b16 %v42
    %v112 = vunpack.c.l.b16 %v43
    %v113 = vunpack.c.l.b16 %v44
    %v114 = vunpack.c.l.b16 %v45
    %v115 = vpack.c.b16 %v112, %v111
    %v116 = vpack.c.b16 %v114, %v113
    %119 = vmatprep.subr.bf16.mxu0 0
    %120 = vmatpush1.bf16.msra.mxu0 %v115
    %121 = vmatprep.subr.bf16.mxu0 0
    %122 = vmatpush1.bf16.msra.mxu0 %v116
    %123 = vmatprep.subr.bf16.mxu0 0
    %124 = vmatpush1.bf16.msra.mxu0 0
    %125 = vmatprep.subr.bf16.mxu0 0
    %126 = vmatpush1.bf16.msra.mxu0 0
    %127 = vmatprep.subr.bf16.mxu0 0
    %128 = vmatpush1.bf16.msra.mxu0 0
    %129 = vmatprep.subr.bf16.mxu0 0
    %130 = vmatpush1.bf16.msra.mxu0 0
    %131 = vmatprep.subr.bf16.mxu0 0
    %132 = vmatpush1.bf16.msra.mxu0 0
    %133 = vmatprep.subr.bf16.mxu0 0
    %134 = vmatpush1.bf16.msra.mxu0 0
    %135 = vmatprep.subr.bf16.mxu0 0
    %136 = vmatpush1.bf16.msra.mxu0 0
    %137 = vmatprep.subr.bf16.mxu0 0
    %138 = vmatpush1.bf16.msra.mxu0 0
    %139 = vmatprep.subr.bf16.mxu0 0
    %140 = vmatpush1.bf16.msra.mxu0 0
    %141 = vmatprep.subr.bf16.mxu0 0
    %142 = vmatpush1.bf16.msra.mxu0 0
    %143 = vmatprep.subr.bf16.mxu0 0
    %144 = vmatpush1.bf16.msra.mxu0 0
    %145 = vmatprep.subr.bf16.mxu0 0
    %146 = vmatpush1.bf16.msra.mxu0 0
    %147 = vmatprep.subr.bf16.mxu0 0
    %148 = vmatpush1.bf16.msra.mxu0 0
    %149 = vmatprep.subr.bf16.mxu0 0
    %150 = vmatpush1.bf16.msra.mxu0 0
    %151 = vmatprep.mubr.bf16.mxu0 0
    %152 = vmatmul.mubr.bf16.gmra.mrb[0].mxu0 %v64
    %v153 = vpop.f32.mrb[0].mxu0
    %v154 = vadd.f32 %v101, %v153
    %v155 = vpop.f32.mrb[0].mxu0
    %v156 = vpop.f32.mrb[0].mxu0
    %v157 = vadd.f32 %v104, %v156
    %v158 = vpop.f32.mrb[0].mxu0
    %159 = vdwg.mxu0
    %v161 = vsel %vm62, %v41, 0
    %163 = vmatprep.subr.bf16.mxu0 0
    %164 = vmatpush1.bf16.msra.mxu0 %v115
    %165 = vmatprep.subr.bf16.mxu0 0
    %166 = vmatpush1.bf16.msra.mxu0 %v116
    %167 = vmatprep.subr.bf16.mxu0 0
    %168 = vmatpush1.bf16.msra.mxu0 0
    %169 = vmatprep.subr.bf16.mxu0 0
    %170 = vmatpush1.bf16.msra.mxu0 0
    %171 = vmatprep.subr.bf16.mxu0 0
    %172 = vmatpush1.bf16.msra.mxu0 0
    %173 = vmatprep.subr.bf16.mxu0 0
    %174 = vmatpush1.bf16.msra.mxu0 0
    %175 = vmatprep.subr.bf16.mxu0 0
    %176 = vmatpush1.bf16.msra.mxu0 0
    %177 = vmatprep.subr.bf16.mxu0 0
    %178 = vmatpush1.bf16.msra.mxu0 0
    %179 = vmatprep.subr.bf16.mxu0 0
    %180 = vmatpush1.bf16.msra.mxu0 0
    %181 = vmatprep.subr.bf16.mxu0 0
    %182 = vmatpush1.bf16.msra.mxu0 0
    %183 = vmatprep.subr.bf16.mxu0 0
    %184 = vmatpush1.bf16.msra.mxu0 0
    %185 = vmatprep.subr.bf16.mxu0 0
    %186 = vmatpush1.bf16.msra.mxu0 0
    %187 = vmatprep.subr.bf16.mxu0 0
    %188 = vmatpush1.bf16.msra.mxu0 0
    %189 = vmatprep.subr.bf16.mxu0 0
    %190 = vmatpush1.bf16.msra.mxu0 0
    %191 = vmatprep.subr.bf16.mxu0 0
    %192 = vmatpush1.bf16.msra.mxu0 0
    %193 = vmatprep.subr.bf16.mxu0 0
    %194 = vmatpush1.bf16.msra.mxu0 0
    %195 = vmatprep.mubr.bf16.mxu0 0
    %196 = vmatmul.mubr.bf16.gmra.mrb[0].mxu0 %v161
    %v197 = vpop.f32.mrb[0].mxu0
    %v198 = vadd.f32 0.0, %v197
    %v199 = vpop.f32.mrb[0].mxu0
    %v200 = vpop.f32.mrb[0].mxu0
    %v201 = vadd.f32 0.0, %v200
    %v202 = vpop.f32.mrb[0].mxu0
    %203 = vdwg.mxu0
    %v204 = vadd.f32 %v154, %v198
    %v205 = vadd.f32 %v157, %v201
    %v206 = vld [vmem:[%s5] sm:$0x1]
    %v207 = vmul.f32 %v204, 2.0
    %v208 = vmul.f32 %v205, 2.0
    %v210 = vlaneseq
    %v211 = vshrl.u32 %v210, 7
    %v212 = vsub.s32 0, %v211
    %v213 = vrot.slane %v206, %v212
    %v215 = vsub.f32 %v213, %v207
    %v216 = vsub.f32 %v213, %v208
    %v217 = vlaneseq
    %v218 = vand.u32 %v217, 127
    %vm219 = vcmask 130048
    %v220 = vsel %vm219, %v215, inf
    %221 = vmin.xlane.f32.xlu0 %v220
    %v222 = vpop.xlane.xlu0 %221
    %v223 = vsel %vm219, %v216, inf
    %224 = vmin.xlane.f32.xlu0 %v223
    %v225 = vpop.xlane.xlu0 %224
    %vm226 = vcmp.eq.f32.partialorder %v215, %v222
    %vm227 = vcmp.eq.f32.partialorder %v216, %v225
    %v228 = vsel %vm226, %v218, 16
    %v229 = vsel %vm227, %v218, 16
    %v230 = vsel %vm219, %v228, 2147483647
    %v231 = vand.u32 %v230, 65535
    %v232 = vshra.s32 %v230, 16
    %v233 = vcvt.s32.f32 %v231
    %v234 = vcvt.s32.f32 %v232
    %235 = vmin.xlane.f32.xlu0 %v234
    %v236 = vpop.xlane.xlu0 %235
    %vm237 = vcmp.eq.f32.partialorder %v234, %v236
    %v238 = vsel %vm237, %v233, inf
    %239 = vmin.xlane.f32.xlu0 %v238
    %v240 = vpop.xlane.xlu0 %239
    %v241 = vcvt.f32.s32 %v240
    %v242 = vcvt.f32.s32 %v236
    %v243 = vshll.u32 %v242, 16
    %v244 = vadd.s32 %v243, %v241
    %v245 = vsel %vm219, %v229, 2147483647
    %v246 = vand.u32 %v245, 65535
    %v247 = vshra.s32 %v245, 16
    %v248 = vcvt.s32.f32 %v246
    %v249 = vcvt.s32.f32 %v247
    %250 = vmin.xlane.f32.xlu0 %v249
    %v251 = vpop.xlane.xlu0 %250
    %vm252 = vcmp.eq.f32.partialorder %v249, %v251
    %v253 = vsel %vm252, %v248, inf
    %254 = vmin.xlane.f32.xlu0 %v253
    %v255 = vpop.xlane.xlu0 %254
    %v256 = vcvt.f32.s32 %v255
    %v257 = vcvt.f32.s32 %v251
    %v258 = vshll.u32 %v257, 16
    %v259 = vadd.s32 %v258, %v256
    %vm260 = vcmp.eq.s32.totalorder %v218, %v244
    %vm261 = vcmp.eq.s32.totalorder %v218, %v259
    %v262 = vsel %vm260, 1, 0
    %v263 = vsel %vm261, 1, 0
    %v264 = vcvt.s32.f32 %v262
    %v265 = vcvt.s32.f32 %v263
    %v266 = vadd.f32 %v264, 0.0
    %v267 = vadd.f32 %v265, 0.0
    %vm268 = vcmask 261248
    %v269 = vsel %vm268, %v215, inf
    %270 = vmin.xlane.f32.xlu0 %v269
    %v271 = vpop.xlane.xlu0 %270
    %v272 = vsel %vm268, %v216, inf
    %273 = vmin.xlane.f32.xlu0 %v272
    %v274 = vpop.xlane.xlu0 %273
    %vm275 = vcmp.eq.f32.partialorder %v215, %v271
    %vm276 = vcmp.eq.f32.partialorder %v216, %v274
    %277 = vrot.lane.b32.xlu0 %v218, 16
    %v278 = vpop.permute.xlu0 %277
    %v279 = vsel %vm275, %v278, 16
    %v280 = vsel %vm276, %v278, 16
    %v281 = vsel %vm268, %v279, 2147483647
    %v282 = vand.u32 %v281, 65535
    %v283 = vshra.s32 %v281, 16
    %v284 = vcvt.s32.f32 %v282
    %v285 = vcvt.s32.f32 %v283
    %286 = vmin.xlane.f32.xlu0 %v285
    %v287 = vpop.xlane.xlu0 %286
    %vm288 = vcmp.eq.f32.partialorder %v285, %v287
    %v289 = vsel %vm288, %v284, inf
    %290 = vmin.xlane.f32.xlu0 %v289
    %v291 = vpop.xlane.xlu0 %290
    %v292 = vcvt.f32.s32 %v291
    %v293 = vcvt.f32.s32 %v287
    %v294 = vshll.u32 %v293, 16
    %v295 = vadd.s32 %v294, %v292
    %v296 = vsel %vm268, %v280, 2147483647
    %v297 = vand.u32 %v296, 65535
    %v298 = vshra.s32 %v296, 16
    %v299 = vcvt.s32.f32 %v297
    %v300 = vcvt.s32.f32 %v298
    %301 = vmin.xlane.f32.xlu0 %v300
    %v302 = vpop.xlane.xlu0 %301
    %vm303 = vcmp.eq.f32.partialorder %v300, %v302
    %v304 = vsel %vm303, %v299, inf
    %305 = vmin.xlane.f32.xlu0 %v304
    %v306 = vpop.xlane.xlu0 %305
    %v307 = vcvt.f32.s32 %v306
    %v308 = vcvt.f32.s32 %v302
    %v309 = vshll.u32 %v308, 16
    %v310 = vadd.s32 %v309, %v307
    %v311 = vadd.s32 %v295, 16
    %v312 = vadd.s32 %v310, 16
    %vm313 = vcmp.eq.s32.totalorder %v218, %v311
    %vm314 = vcmp.eq.s32.totalorder %v218, %v312
    %v315 = vsel %vm313, 1, 0
    %v316 = vsel %vm314, 1, 0
    %v317 = vcvt.s32.f32 %v315
    %v318 = vcvt.s32.f32 %v316
    %v319 = vadd.f32 %v266, %v317
    %v320 = vadd.f32 %v267, %v318
    %vm321 = vcmask 392448
    %v322 = vsel %vm321, %v215, inf
    %323 = vmin.xlane.f32.xlu0 %v322
    %v324 = vpop.xlane.xlu0 %323
    %v325 = vsel %vm321, %v216, inf
    %326 = vmin.xlane.f32.xlu0 %v325
    %v327 = vpop.xlane.xlu0 %326
    %vm328 = vcmp.eq.f32.partialorder %v215, %v324
    %vm329 = vcmp.eq.f32.partialorder %v216, %v327
    %330 = vrot.lane.b32.xlu0 %v218, 32
    %v331 = vpop.permute.xlu0 %330
    %v332 = vsel %vm328, %v331, 16
    %v333 = vsel %vm329, %v331, 16
    %v334 = vsel %vm321, %v332, 2147483647
    %v335 = vand.u32 %v334, 65535
    %v336 = vshra.s32 %v334, 16
    %v337 = vcvt.s32.f32 %v335
    %v338 = vcvt.s32.f32 %v336
    %339 = vmin.xlane.f32.xlu0 %v338
    %v340 = vpop.xlane.xlu0 %339
    %vm341 = vcmp.eq.f32.partialorder %v338, %v340
    %v342 = vsel %vm341, %v337, inf
    %343 = vmin.xlane.f32.xlu0 %v342
    %v344 = vpop.xlane.xlu0 %343
    %v345 = vcvt.f32.s32 %v344
    %v346 = vcvt.f32.s32 %v340
    %v347 = vshll.u32 %v346, 16
    %v348 = vadd.s32 %v347, %v345
    %v349 = vsel %vm321, %v333, 2147483647
    %v350 = vand.u32 %v349, 65535
    %v351 = vshra.s32 %v349, 16
    %v352 = vcvt.s32.f32 %v350
    %v353 = vcvt.s32.f32 %v351
    %354 = vmin.xlane.f32.xlu0 %v353
    %v355 = vpop.xlane.xlu0 %354
    %vm356 = vcmp.eq.f32.partialorder %v353, %v355
    %v357 = vsel %vm356, %v352, inf
    %358 = vmin.xlane.f32.xlu0 %v357
    %v359 = vpop.xlane.xlu0 %358
    %v360 = vcvt.f32.s32 %v359
    %v361 = vcvt.f32.s32 %v355
    %v362 = vshll.u32 %v361, 16
    %v363 = vadd.s32 %v362, %v360
    %v364 = vadd.s32 %v348, 32
    %v365 = vadd.s32 %v363, 32
    %vm366 = vcmp.eq.s32.totalorder %v218, %v364
    %vm367 = vcmp.eq.s32.totalorder %v218, %v365
    %v368 = vsel %vm366, 1, 0
    %v369 = vsel %vm367, 1, 0
    %v370 = vcvt.s32.f32 %v368
    %v371 = vcvt.s32.f32 %v369
    %v372 = vadd.f32 %v319, %v370
    %v373 = vadd.f32 %v320, %v371
    %vm374 = vcmask 523648
    %v375 = vsel %vm374, %v215, inf
    %376 = vmin.xlane.f32.xlu0 %v375
    %v377 = vpop.xlane.xlu0 %376
    %v378 = vsel %vm374, %v216, inf
    %379 = vmin.xlane.f32.xlu0 %v378
    %v380 = vpop.xlane.xlu0 %379
    %vm381 = vcmp.eq.f32.partialorder %v215, %v377
    %vm382 = vcmp.eq.f32.partialorder %v216, %v380
    %383 = vrot.lane.b32.xlu0 %v218, 48
    %v384 = vpop.permute.xlu0 %383
    %v385 = vsel %vm381, %v384, 16
    %v386 = vsel %vm382, %v384, 16
    %v387 = vsel %vm374, %v385, 2147483647
    %v388 = vand.u32 %v387, 65535
    %v389 = vshra.s32 %v387, 16
    %v390 = vcvt.s32.f32 %v388
    %v391 = vcvt.s32.f32 %v389
    %392 = vmin.xlane.f32.xlu0 %v391
    %v393 = vpop.xlane.xlu0 %392
    %vm394 = vcmp.eq.f32.partialorder %v391, %v393
    %v395 = vsel %vm394, %v390, inf
    %396 = vmin.xlane.f32.xlu0 %v395
    %v397 = vpop.xlane.xlu0 %396
    %v398 = vcvt.f32.s32 %v397
    %v399 = vcvt.f32.s32 %v393
    %v400 = vshll.u32 %v399, 16
    %v401 = vadd.s32 %v400, %v398
    %v402 = vsel %vm374, %v386, 2147483647
    %v403 = vand.u32 %v402, 65535
    %v404 = vshra.s32 %v402, 16
    %v405 = vcvt.s32.f32 %v403
    %v406 = vcvt.s32.f32 %v404
    %407 = vmin.xlane.f32.xlu0 %v406
    %v408 = vpop.xlane.xlu0 %407
    %vm409 = vcmp.eq.f32.partialorder %v406, %v408
    %v410 = vsel %vm409, %v405, inf
    %411 = vmin.xlane.f32.xlu0 %v410
    %v412 = vpop.xlane.xlu0 %411
    %v413 = vcvt.f32.s32 %v412
    %v414 = vcvt.f32.s32 %v408
    %v415 = vshll.u32 %v414, 16
    %v416 = vadd.s32 %v415, %v413
    %v417 = vadd.s32 %v401, 48
    %v418 = vadd.s32 %v416, 48
    %vm419 = vcmp.eq.s32.totalorder %v218, %v417
    %vm420 = vcmp.eq.s32.totalorder %v218, %v418
    %v421 = vsel %vm419, 1, 0
    %v422 = vsel %vm420, 1, 0
    %v423 = vcvt.s32.f32 %v421
    %v424 = vcvt.s32.f32 %v422
    %v425 = vadd.f32 %v372, %v423
    %v426 = vadd.f32 %v373, %v424
    %vm427 = vcmask 7168
    %v428 = vsel %vm427, %v244, %v295
    %v429 = vsel %vm427, %v259, %v310
    %vm430 = vcmask 15360
    %v431 = vsel %vm430, %v428, %v348
    %v432 = vsel %vm430, %v429, %v363
    %vm433 = vcmask 23552
    %v434 = vsel %vm433, %v431, %v401
    %v435 = vsel %vm433, %v432, %v416
    %vm436 = vcmask 31744
    %437 = vst.msk [vmem:[%s9] sm:$0xff] %vm436, %v434
    %438 = vst.msk [vmem:[%s9 + $0x8] sm:$0xff] %vm436, %v435
    %v439 = vpack.c.bf16 %v426, %v425
    %v440 = vld [vmem:[%s3] sm:$0xf]
    %v441 = vld [vmem:[%s3 + $0x4] sm:$0xf]
    %v442 = vld [vmem:[%s3 + $0x8] sm:$0xf]
    %v443 = vld [vmem:[%s3 + $0xc] sm:$0xf]
    %v444 = vld [vmem:[%s3 + $0x10] sm:$0xf]
    %v445 = vld [vmem:[%s3 + $0x14] sm:$0xf]
    %v446 = vld [vmem:[%s3 + $0x18] sm:$0xf]
    %v447 = vld [vmem:[%s3 + $0x1c] sm:$0xf]
    %v448 = vld [vmem:[%s4] sm:$0xf]
    %v449 = vld [vmem:[%s4 + $0x4] sm:$0xf]
    %v450 = vld [vmem:[%s4 + $0x8] sm:$0xf]
    %v451 = vld [vmem:[%s4 + $0xc] sm:$0xf]
    %v452 = vld [vmem:[%s4 + $0x10] sm:$0xf]
    %v453 = vld [vmem:[%s4 + $0x14] sm:$0xf]
    %v454 = vld [vmem:[%s4 + $0x18] sm:$0xf]
    %v455 = vld [vmem:[%s4 + $0x1c] sm:$0xf]
    %v464 = vunpack.c.l.b16 %v448
    %v465 = vunpack.c.l.b16 %v449
    %v466 = vunpack.c.l.b16 %v450
    %v467 = vunpack.c.l.b16 %v451
    %v468 = vunpack.c.l.b16 %v452
    %v469 = vunpack.c.l.b16 %v453
    %v470 = vunpack.c.l.b16 %v454
    %v471 = vunpack.c.l.b16 %v455
    %v472 = vpack.c.b16 %v465, %v464
    %v473 = vpack.c.b16 %v467, %v466
    %v474 = vpack.c.b16 %v469, %v468
    %v475 = vpack.c.b16 %v471, %v470
    %vm480 = vcmask 523264
    %v482 = vsel %vm480, %v439, 0
    %484 = vmatprep.subr.bf16.mxu0 0
    %485 = vmatpush1.bf16.msra.mxu0 %v472
    %486 = vmatprep.subr.bf16.mxu0 0
    %487 = vmatpush1.bf16.msra.mxu0 %v473
    %488 = vmatprep.subr.bf16.mxu0 0
    %489 = vmatpush1.bf16.msra.mxu0 %v474
    %490 = vmatprep.subr.bf16.mxu0 0
    %491 = vmatpush1.bf16.msra.mxu0 %v475
    %492 = vmatprep.subr.bf16.mxu0 0
    %493 = vmatpush1.bf16.msra.mxu0 0
    %494 = vmatprep.subr.bf16.mxu0 0
    %495 = vmatpush1.bf16.msra.mxu0 0
    %496 = vmatprep.subr.bf16.mxu0 0
    %497 = vmatpush1.bf16.msra.mxu0 0
    %498 = vmatprep.subr.bf16.mxu0 0
    %499 = vmatpush1.bf16.msra.mxu0 0
    %500 = vmatprep.subr.bf16.mxu0 0
    %501 = vmatpush1.bf16.msra.mxu0 0
    %502 = vmatprep.subr.bf16.mxu0 0
    %503 = vmatpush1.bf16.msra.mxu0 0
    %504 = vmatprep.subr.bf16.mxu0 0
    %505 = vmatpush1.bf16.msra.mxu0 0
    %506 = vmatprep.subr.bf16.mxu0 0
    %507 = vmatpush1.bf16.msra.mxu0 0
    %508 = vmatprep.subr.bf16.mxu0 0
    %509 = vmatpush1.bf16.msra.mxu0 0
    %510 = vmatprep.subr.bf16.mxu0 0
    %511 = vmatpush1.bf16.msra.mxu0 0
    %512 = vmatprep.subr.bf16.mxu0 0
    %513 = vmatpush1.bf16.msra.mxu0 0
    %514 = vmatprep.subr.bf16.mxu0 0
    %515 = vmatpush1.bf16.msra.mxu0 0
    %516 = vmatprep.mubr.bf16.mxu0 0
    %517 = vmatmul.mubr.bf16.gmra.mrb[0].mxu0 %v482
    %v518 = vpop.f32.mrb[0].mxu0
    %v519 = vadd.f32 0.0, %v518
    %v520 = vpop.f32.mrb[0].mxu0
    %v521 = vpop.f32.mrb[0].mxu0
    %v522 = vadd.f32 0.0, %v521
    %v523 = vpop.f32.mrb[0].mxu0
    %524 = vdwg.mxu0
    %v533 = vunpack.c.l.b16 %v440
    %v534 = vunpack.c.l.b16 %v441
    %v535 = vunpack.c.l.b16 %v442
    %v536 = vunpack.c.l.b16 %v443
    %v537 = vunpack.c.l.b16 %v444
    %v538 = vunpack.c.l.b16 %v445
    %v539 = vunpack.c.l.b16 %v446
    %v540 = vunpack.c.l.b16 %v447
    %v541 = vpack.c.b16 %v534, %v533
    %v542 = vpack.c.b16 %v536, %v535
    %v543 = vpack.c.b16 %v538, %v537
    %v544 = vpack.c.b16 %v540, %v539
    %549 = vmatprep.subr.bf16.mxu0 0
    %550 = vmatpush1.bf16.msra.mxu0 %v541
    %551 = vmatprep.subr.bf16.mxu0 0
    %552 = vmatpush1.bf16.msra.mxu0 %v542
    %553 = vmatprep.subr.bf16.mxu0 0
    %554 = vmatpush1.bf16.msra.mxu0 %v543
    %555 = vmatprep.subr.bf16.mxu0 0
    %556 = vmatpush1.bf16.msra.mxu0 %v544
    %557 = vmatprep.subr.bf16.mxu0 0
    %558 = vmatpush1.bf16.msra.mxu0 0
    %559 = vmatprep.subr.bf16.mxu0 0
    %560 = vmatpush1.bf16.msra.mxu0 0
    %561 = vmatprep.subr.bf16.mxu0 0
    %562 = vmatpush1.bf16.msra.mxu0 0
    %563 = vmatprep.subr.bf16.mxu0 0
    %564 = vmatpush1.bf16.msra.mxu0 0
    %565 = vmatprep.subr.bf16.mxu0 0
    %566 = vmatpush1.bf16.msra.mxu0 0
    %567 = vmatprep.subr.bf16.mxu0 0
    %568 = vmatpush1.bf16.msra.mxu0 0
    %569 = vmatprep.subr.bf16.mxu0 0
    %570 = vmatpush1.bf16.msra.mxu0 0
    %571 = vmatprep.subr.bf16.mxu0 0
    %572 = vmatpush1.bf16.msra.mxu0 0
    %573 = vmatprep.subr.bf16.mxu0 0
    %574 = vmatpush1.bf16.msra.mxu0 0
    %575 = vmatprep.subr.bf16.mxu0 0
    %576 = vmatpush1.bf16.msra.mxu0 0
    %577 = vmatprep.subr.bf16.mxu0 0
    %578 = vmatpush1.bf16.msra.mxu0 0
    %579 = vmatprep.subr.bf16.mxu0 0
    %580 = vmatpush1.bf16.msra.mxu0 0
    %581 = vmatprep.mubr.bf16.mxu0 0
    %582 = vmatmul.mubr.bf16.gmra.mrb[0].mxu0 %v482
    %v583 = vpop.f32.mrb[0].mxu0
    %v584 = vadd.f32 %v519, %v583
    %v585 = vpop.f32.mrb[0].mxu0
    %v586 = vpop.f32.mrb[0].mxu0
    %v587 = vadd.f32 %v522, %v586
    %v588 = vpop.f32.mrb[0].mxu0
    %589 = vdwg.mxu0
    %v590 = vlaneseq
    %v591 = vshrl.u32 %v590, 7
    %v592 = vadd.s32 %v591, 8
    %s593 = smul.u32 0, 16
    %v594 = vstv %s593
    %v595 = vadd.s32 %v591, %v594
    %v596 = vadd.s32 %v592, %v594
    %vm597 = vcmp.lt.s32.totalorder %v595, 16
    %vm598 = vcmp.lt.s32.totalorder %v596, 16
    %v599 = vsub.f32 %v584, %v34
    %v600 = vsub.f32 %v587, %v35
    %v601 = vsel %vm597, 1, 0
    %v602 = vsel %vm598, 1, 0
    %vm603 = vcmp.eq.s32.totalorder %v601, 1
    %vm604 = vcmp.eq.s32.totalorder %v602, 1
    %v605 = vsel %vm603, %v599, 0.0
    %v606 = vsel %vm604, %v600, 0.0
    %v607 = vmul.f32 %v605, %v605
    %v608 = vmul.f32 %v606, %v606
    %v609 = vsel %vm62, %v607, 0.0
    %v610 = vsel %vm62, %v608, 0.0
    %v611 = vadd.f32 %v609, %v610
    %v612 = vrot.slane %v611, 4
    %v613 = vadd.f32 %v611, %v612
    %v614 = vrot.slane %v613, 2
    %v615 = vadd.f32 %v613, %v614
    %v616 = vrot.slane %v615, 1
    %v617 = vadd.f32 %v615, %v616
    %vm618 = vcmask 253952
    %619 = vst.msk [vmem:[%s10] sm:$0x1] %vm618, %v617
    %v620 = vpack.c.bf16 %v587, %v584
    %v621 = vld [vmem:[%s6] sm:$0xf]
    %v622 = vld [vmem:[%s6 + $0x4] sm:$0xf]
    %v623 = vld [vmem:[%s6 + $0x8] sm:$0xf]
    %v624 = vld [vmem:[%s6 + $0xc] sm:$0xf]
    %v625 = vld [vmem:[%s7] sm:$0x1]
    %v627 = vlaneseq
    %v628 = vshrl.u32 %v627, 7
    %v629 = vsub.s32 0, %v628
    %v630 = vrot.slane %v625, %v629
    %v636 = vunpack.c.l.b16 %v621
    %v637 = vunpack.c.l.b16 %v622
    %v638 = vunpack.c.l.b16 %v623
    %v639 = vunpack.c.l.b16 %v624
    %v640 = vpack.c.b16 %v637, %v636
    %v641 = vpack.c.b16 %v639, %v638
    %v645 = vsel %vm62, %v620, 0
    %647 = vmatprep.subr.bf16.mxu0 0
    %648 = vmatpush1.bf16.msra.mxu0 %v640
    %649 = vmatprep.subr.bf16.mxu0 0
    %650 = vmatpush1.bf16.msra.mxu0 %v641
    %651 = vmatprep.subr.bf16.mxu0 0
    %652 = vmatpush1.bf16.msra.mxu0 0
    %653 = vmatprep.subr.bf16.mxu0 0
    %654 = vmatpush1.bf16.msra.mxu0 0
    %655 = vmatprep.subr.bf16.mxu0 0
    %656 = vmatpush1.bf16.msra.mxu0 0
    %657 = vmatprep.subr.bf16.mxu0 0
    %658 = vmatpush1.bf16.msra.mxu0 0
    %659 = vmatprep.subr.bf16.mxu0 0
    %660 = vmatpush1.bf16.msra.mxu0 0
    %661 = vmatprep.subr.bf16.mxu0 0
    %662 = vmatpush1.bf16.msra.mxu0 0
    %663 = vmatprep.subr.bf16.mxu0 0
    %664 = vmatpush1.bf16.msra.mxu0 0
    %665 = vmatprep.subr.bf16.mxu0 0
    %666 = vmatpush1.bf16.msra.mxu0 0
    %667 = vmatprep.subr.bf16.mxu0 0
    %668 = vmatpush1.bf16.msra.mxu0 0
    %669 = vmatprep.subr.bf16.mxu0 0
    %670 = vmatpush1.bf16.msra.mxu0 0
    %671 = vmatprep.subr.bf16.mxu0 0
    %672 = vmatpush1.bf16.msra.mxu0 0
    %673 = vmatprep.subr.bf16.mxu0 0
    %674 = vmatpush1.bf16.msra.mxu0 0
    %675 = vmatprep.subr.bf16.mxu0 0
    %676 = vmatpush1.bf16.msra.mxu0 0
    %677 = vmatprep.subr.bf16.mxu0 0
    %678 = vmatpush1.bf16.msra.mxu0 0
    %679 = vmatprep.mubr.bf16.mxu0 0
    %680 = vmatmul.mubr.bf16.gmra.mrb[0].mxu0 %v645
    %v681 = vpop.f32.mrb[0].mxu0
    %v682 = vadd.f32 %v630, %v681
    %v683 = vpop.f32.mrb[0].mxu0
    %v684 = vpop.f32.mrb[0].mxu0
    %v685 = vadd.f32 %v630, %v684
    %v686 = vpop.f32.mrb[0].mxu0
    %687 = vdwg.mxu0
    %688 = vst.msk [vmem:[#allocation2] sm:$0xff] %vm62, %v682
    %689 = vst.msk [vmem:[#allocation2 + $0x8] sm:$0xff] %vm62, %v685
    // Predicated region
    $region34: #{quantize_forward.1} parent=1 // pred_check
      _
    $region35: #{quantize_forward.1} parent=1 // pred_check_branch
      %691 = sbr.rel (0) target = $region37
    $region36: #{quantize_forward.1} parent=1 // pred_region
      %s693 = ssub.s32 256, 256
      %694 = vsyncadd [#allocation3], %s693
      %s695 = sshll.u32 [#allocation2], 4
      %s696 = int_to_ptr.vmem [resolvable:$true] %s695
      %701 = dma.vmem_to_hbm [thread:$0]  %s696, 256, %s8, [#allocation3], 128, 128, 8
    $region37: #{quantize_forward.1} parent=1 // pred_fallthru
      _
    // Predicated region
    $region38: #{quantize_forward.1} parent=1 // pred_check
      _
    $region39: #{quantize_forward.1} parent=1 // pred_check_branch
      %703 = sbr.rel (0) target = $region41
    $region40: #{quantize_forward.1} parent=1 // pred_region
      _
    $region41: #{quantize_forward.1} parent=1 // pred_fallthru
      _
    // Predicated region
    $region42: #{quantize_forward.1} parent=1 // pred_check
      _
    $region43: #{quantize_forward.1} parent=1 // pred_check_branch
      %705 = sbr.rel (0) target = $region45
    $region44: #{quantize_forward.1} parent=1 // pred_region
      _
    $region45: #{quantize_forward.1} parent=1 // pred_fallthru
      _
    // Predicated region
    $region46: #{quantize_forward.1} parent=1 // pred_check
      _
    $region47: #{quantize_forward.1} parent=1 // pred_check_branch
      %707 = sbr.rel (0) target = $region49
    $region48: #{quantize_forward.1} parent=1 // pred_region
      %708 = dma.done [#allocation3], 256
    $region49: #{quantize_forward.1} parent=1 // pred_fallthru
      _
    // Predicated region
    $region50: #{quantize_forward.1} parent=1 // pred_check
      _
    $region51: #{quantize_forward.1} parent=1 // pred_check_branch
      %710 = sbr.rel (0) target = $region53
    $region52: #{quantize_forward.1} parent=1 // pred_region
      _
    $region53: #{quantize_forward.1} parent=1 // pred_fallthru
      _
    // Predicated region
    $region54: #{quantize_forward.1} parent=1 // pred_check
      _
    $region55: #{quantize_forward.1} parent=1 // pred_check_branch
      %712 = sbr.rel (0) target = $region57
    $region56: #{quantize_forward.1} parent=1 // pred_region
      _
    $region57: #{quantize_forward.1} parent=1 // pred_fallthru
      _
    %713 = vsyncpa [#allocation3], 1

</llo_original>
